<compile_context>
chip_gen: v5e
topology: v5e:2x2
jax: 0.10.0
libtpu: 0.0.40
codegen_flags: <defaults>
</compile_context>

<pallas_src>
import functools

import numpy as np
import jax
import jax.numpy as jnp
from jax.experimental import pallas as pl
from jax.experimental.pallas import tpu as pltpu


# --------------------------------------------------------------------------
# Generation-aware VMEM budget / row tile
# --------------------------------------------------------------------------
def _query_vmem_capacity():
    try:
        return int(pltpu.get_tpu_info().vmem_capacity_bytes)
    except Exception:
        return 64 * 1024 * 1024          # assume the smallest (v7x-like) VMEM


_VMEM_CAP = _query_vmem_capacity()
_VMEM_LIMIT = int(min(max(_VMEM_CAP - 16 * 2**20, 32 * 2**20), 112 * 2**20))
_ROW_TILE = 1024 if _VMEM_LIMIT >= 96 * 2**20 else 512


def _round_up(x, m):
    return ((x + m - 1) // m) * m


# --------------------------------------------------------------------------
# Pallas kernels
# --------------------------------------------------------------------------
def _mm_bn_act_kernel(*refs, relu, has_identity):
    """y = A @ B (f32 acc); epilogue: *scale + shift (+identity) (+ReLU)."""
    if has_identity:
        a_ref, b_ref, scale_ref, shift_ref, id_ref, o_ref = refs
    else:
        a_ref, b_ref, scale_ref, shift_ref, o_ref = refs
        id_ref = None

    y = jnp.dot(a_ref[...], b_ref[...], preferred_element_type=jnp.float32)
    y = y * scale_ref[...] + shift_ref[...]
    if has_identity:
        y = y + id_ref[...].astype(jnp.float32)
    if relu:
        y = jnp.maximum(y, 0.0)
    o_ref[...] = y.astype(o_ref.dtype)


def _conv3x3_s1_kernel(x_ref, w_ref, scale_ref, shift_ref, o_ref, patch_ref,
                       *, h, w, cin, relu):
    """Stride-1 3x3 conv on one image.

    The padded plane arrives flattened as ((h+3)*(w+2), cin); each of the 9
    taps is a *contiguous* shifted slab of it, copied into the (h*(w+2), 9*cin)
    patch scratch (in-VMEM im2col, taps stacked along K), followed by a single
    MXU matmul.  The two junk columns per row (row wrap) are sliced off before
    the store.
    """
    wp = w + 2
    m_rows = h * wp
    for t in range(9):
        dy, dx = divmod(t, 3)
        off = dy * wp + dx
        patch_ref[:, t * cin:(t + 1) * cin] = x_ref[0, off:off + m_rows, :]

    y = jnp.dot(patch_ref[...], w_ref[...], preferred_element_type=jnp.float32)
    y = y * scale_ref[...] + shift_ref[...]
    if relu:
        y = jnp.maximum(y, 0.0)
    y = y.astype(o_ref.dtype).reshape(h, wp, -1)
    o_ref[0] = y[:, :w, :]


def _maxpool3x3_s2_kernel(x5_ref, o_ref, *, ho, wo, c):
    """3x3/stride-2 max pool, writing the subsampled output directly.

    The input is pre-reshaped (free, row-major) to (1, Hp/2, 2, Wp/2, 2*c) so
    every tap is a plain contiguous slice (parity picks the sub-row / lane
    half) -- no strided loads, no dense intermediate in HBM.
    """
    m = None
    for dy in range(3):
        rp, sr = (slice(0, ho), dy) if dy < 2 else (slice(1, 1 + ho), 0)
        for dx in range(3):
            cp, sc = (slice(0, wo), dx) if dx < 2 else (slice(1, 1 + wo), 0)
            t = x5_ref[0, rp, sr, cp, sc * c:(sc + 1) * c]
            m = t if m is None else jnp.maximum(m, t)
    o_ref[0] = m


def _global_mean_kernel(x_ref, o_ref):
    o_ref[...] = jnp.mean(x_ref[...].astype(jnp.float32), axis=1, keepdims=True)


# --------------------------------------------------------------------------
# Pallas wrappers
# --------------------------------------------------------------------------
def matmul_bn_act(a, b, scale, shift, *, relu, identity=None,
                  out_dtype=jnp.bfloat16):
    """a:(M,K) @ b:(K,N) bf16 on the MXU, f32 acc, fused BN/residual/ReLU.

    Weight (and scale/shift) use a constant full-extent block so they are
    DMA'd once and stay VMEM-resident across all row tiles; the row grid uses
    cdiv so no activation padding is needed for ragged M.
    """
    a = a.astype(jnp.bfloat16)
    M, K = a.shape
    _, N = b.shape

    m_pad = (-M) % 8              # only the fc / 1x1-spatial layers hit this
    if m_pad:
        a = jnp.pad(a, ((0, m_pad), (0, 0)))
        if identity is not None:
            identity = jnp.pad(identity, ((0, m_pad), (0, 0)))
    Mp = M + m_pad

    tm = min(_ROW_TILE, Mp)
    grid = (pl.cdiv(Mp, tm),)

    inputs = [a, b, scale, shift]
    in_specs = [
        pl.BlockSpec((tm, K), lambda i: (i, 0)),
        pl.BlockSpec((K, N), lambda i: (0, 0)),     # weight resident in VMEM
        pl.BlockSpec((1, N), lambda i: (0, 0)),
        pl.BlockSpec((1, N), lambda i: (0, 0)),
    ]
    if identity is not None:
        inputs.append(identity.astype(jnp.bfloat16))
        in_specs.append(pl.BlockSpec((tm, N), lambda i: (i, 0)))

    kern = functools.partial(_mm_bn_act_kernel, relu=relu,
                             has_identity=identity is not None)
    out = pl.pallas_call(
        kern,
        out_shape=jax.ShapeDtypeStruct((Mp, N), out_dtype),
        grid_spec=pltpu.PrefetchScalarGridSpec(
            num_scalar_prefetch=0,
            grid=grid,
            in_specs=in_specs,
            out_specs=pl.BlockSpec((tm, N), lambda i: (i, 0)),
        ),
        compiler_params=pltpu.CompilerParams(
            dimension_semantics=("parallel",),
            vmem_limit_bytes=_VMEM_LIMIT),
    )(*inputs)
    if m_pad:
        out = out[:M]
    return out


def conv3x3_s1_bn_act(x, p, *, relu):
    """Stride-1 3x3 conv + folded BN (+ReLU), no im2col through HBM."""
    n, h, w, cin = x.shape
    cout = p["cout"]
    # pad: 1 top/left/right, 2 bottom (one guard row keeps the last tap's
    # shifted flat slab in bounds).
    xp = jnp.pad(x, ((0, 0), (1, 2), (1, 1), (0, 0)))
    L = (h + 3) * (w + 2)
    xf = xp.reshape(n, L, cin)

    kern = functools.partial(_conv3x3_s1_kernel, h=h, w=w, cin=cin, relu=relu)
    return pl.pallas_call(
        kern,
        out_shape=jax.ShapeDtypeStruct((n, h, w, cout), jnp.bfloat16),
        grid_spec=pltpu.PrefetchScalarGridSpec(
            num_scalar_prefetch=0,
            grid=(n,),
            in_specs=[
                pl.BlockSpec((1, L, cin), lambda b: (b, 0, 0)),
                pl.BlockSpec((9 * cin, cout), lambda b: (0, 0)),
                pl.BlockSpec((1, cout), lambda b: (0, 0)),
                pl.BlockSpec((1, cout), lambda b: (0, 0)),
            ],
            out_specs=pl.BlockSpec((1, h, w, cout), lambda b: (b, 0, 0, 0)),
            scratch_shapes=[pltpu.VMEM((h * (w + 2), 9 * cin), jnp.bfloat16)],
        ),
        compiler_params=pltpu.CompilerParams(
            dimension_semantics=("parallel",),
            vmem_limit_bytes=_VMEM_LIMIT),
    )(xf, p["w"], p["scale"], p["shift"])


def maxpool_3x3_s2(x):
    """3x3 max pool, stride 2, padding 1 (NHWC), subsampled output in-kernel."""
    n, h, w, c = x.shape
    ho = (h - 1) // 2 + 1
    wo = (w - 1) // 2 + 1
    pad_b = 1 + (h % 2)          # make the padded height even
    pad_r = 1 + (w % 2)          # make the padded width even
    xp = jnp.pad(x, ((0, 0), (1, pad_b), (1, pad_r), (0, 0)),
                 constant_values=-jnp.inf)
    hp = h + 1 + pad_b
    wp = w + 1 + pad_r
    # (pair, parity) split of both spatial axes -- a free row-major reshape.
    x5 = xp.reshape(n, hp // 2, 2, wp // 2, 2 * c)

    kern = functools.partial(_maxpool3x3_s2_kernel, ho=ho, wo=wo, c=c)
    return pl.pallas_call(
        kern,
        out_shape=jax.ShapeDtypeStruct((n, ho, wo, c), x.dtype),
        grid_spec=pltpu.PrefetchScalarGridSpec(
            num_scalar_prefetch=0,
            grid=(n,),
            in_specs=[pl.BlockSpec((1, hp // 2, 2, wp // 2, 2 * c),
                                   lambda b: (b, 0, 0, 0, 0))],
            out_specs=pl.BlockSpec((1, ho, wo, c), lambda b: (b, 0, 0, 0)),
        ),
        compiler_params=pltpu.CompilerParams(
            dimension_semantics=("parallel",),
            vmem_limit_bytes=_VMEM_LIMIT),
    )(x5)


def global_avgpool(x):
    n, h, w, c = x.shape
    x3 = x.reshape(n, h * w, c)
    out = pl.pallas_call(
        _global_mean_kernel,
        out_shape=jax.ShapeDtypeStruct((n, 1, c), jnp.float32),
        grid_spec=pltpu.PrefetchScalarGridSpec(
            num_scalar_prefetch=0,
            grid=(n,),
            in_specs=[pl.BlockSpec((1, h * w, c), lambda b: (b, 0, 0))],
            out_specs=pl.BlockSpec((1, 1, c), lambda b: (b, 0, 0)),
        ),
        compiler_params=pltpu.CompilerParams(
            dimension_semantics=("parallel",),
            vmem_limit_bytes=_VMEM_LIMIT),
    )(x3)
    return out[:, 0, :]


# --------------------------------------------------------------------------
# Conv dispatcher (1x1 direct, 3x3/s1 fused, im2col fallback)
# --------------------------------------------------------------------------
def _im2col(x, kh, kw, stride, pad):
    x = jnp.pad(x, ((0, 0), (pad, pad), (pad, pad), (0, 0)))
    n, hp, wp, c = x.shape
    ho = (hp - kh) // stride + 1
    wo = (wp - kw) // stride + 1
    cols = [x[:, i:i + stride * ho:stride, j:j + stride * wo:stride, :]
            for i in range(kh) for j in range(kw)]
    patches = jnp.concatenate(cols, axis=-1)
    return patches.reshape(n * ho * wo, kh * kw * c), (n, ho, wo)


def conv_bn_act(x, p, *, stride, relu, identity=None):
    """Conv2d (no bias) + folded BN (+ residual add) (+ ReLU)."""
    kh, kw = p["kh"], p["kw"]
    cin, cout = p["cin"], p["cout"]

    if kh == 1 and kw == 1:
        if stride > 1:
            x = x[:, ::stride, ::stride, :]
        n, ho, wo, _ = x.shape
        a = x.reshape(n * ho * wo, cin)
        idm = (identity.reshape(n * ho * wo, cout)
               if identity is not None else None)
        y = matmul_bn_act(a, p["w"], p["scale"], p["shift"],
                          relu=relu, identity=idm)
        return y.reshape(n, ho, wo, cout)

    if kh == 3 and kw == 3 and stride == 1 and identity is None:
        return conv3x3_s1_bn_act(x, p, relu=relu)

    # Fallback (7x7 stem, the three stride-2 3x3 convs): XLA-side im2col
    # feeding the fused Pallas matmul.
    # TODO(synk): the stride-2 3x3 convs could also subsample in-kernel; they
    # are a small fraction of total work so im2col is kept for them.
    a, (n, ho, wo) = _im2col(x, kh, kw, stride, p["pad"])
    idm = (identity.reshape(n * ho * wo, cout)
           if identity is not None else None)
    y = matmul_bn_act(a, p["w"], p["scale"], p["shift"],
                      relu=relu, identity=idm)
    return y.reshape(n, ho, wo, cout)


# --------------------------------------------------------------------------
# Deterministic parameter initialization (ResNet-50 shapes, kernel-ready
# layouts built once here, not per forward pass)
# --------------------------------------------------------------------------
def _conv_bn_params(key, kh, kw, cin, cout, *, cin_pad=None):
    k1, k2, k3 = jax.random.split(key, 3)
    w = jax.random.normal(k1, (kh, kw, cin, cout), jnp.float32)
    w = w / np.sqrt(kh * kw * cin)
    if cin_pad is not None and cin_pad > cin:
        w = jnp.pad(w, ((0, 0), (0, 0), (0, cin_pad - cin), (0, 0)))
        cin = cin_pad
    gamma = 1.0 + 0.1 * jax.random.normal(k2, (cout,), jnp.float32)
    beta = 0.1 * jax.random.normal(k3, (cout,), jnp.float32)
    running_mean = jnp.zeros((cout,), jnp.float32)
    running_var = jnp.ones((cout,), jnp.float32)
    eps = 1e-5
    scale = gamma / jnp.sqrt(running_var + eps)
    shift = beta - running_mean * scale
    return {
        "kh": kh, "kw": kw, "cin": cin, "cout": cout, "pad": (kh - 1) // 2,
        # (K, N) bf16 matmul operand, rows ordered (dy, dx, ci) to match both
        # the im2col patch layout and the fused kernel's tap stacking.
        "w": w.reshape(kh * kw * cin, cout).astype(jnp.bfloat16),
        "scale": scale.reshape(1, cout),
        "shift": shift.reshape(1, cout),
    }


def _bottleneck_params(key, cin, planes, stride):
    keys = jax.random.split(key, 4)
    p = {
        "conv1": _conv_bn_params(keys[0], 1, 1, cin, planes),
        "conv2": _conv_bn_params(keys[1], 3, 3, planes, planes),
        "conv3": _conv_bn_params(keys[2], 1, 1, planes, planes * 4),
        "stride": stride,
    }
    if stride != 1 or cin != planes * 4:
        p["downsample"] = _conv_bn_params(keys[3], 1, 1, cin, planes * 4)
    return p


def init_resnet50_binary_params(key, in_channels=5):
    keys = jax.random.split(key, 8)
    cin_pad = _round_up(in_channels, 8)     # stem K = 49*8, sublane-aligned
    params = {"conv1": _conv_bn_params(keys[0], 7, 7, in_channels, 64,
                                       cin_pad=cin_pad)}
    cfg = [(64, 3, 1), (128, 4, 2), (256, 6, 2), (512, 3, 2)]
    cin = 64
    for li, (planes, blocks, stride) in enumerate(cfg):
        bkeys = jax.random.split(keys[1 + li], blocks)
        layer = []
        for b in range(blocks):
            s = stride if b == 0 else 1
            layer.append(_bottleneck_params(bkeys[b], cin, planes, s))
            cin = planes * 4
        params[f"layer{li + 1}"] = layer
    # fc head: single logit, weight/bias padded to 128 lanes once, here.
    fc_w = jax.random.normal(keys[5], (2048, 1), jnp.float32) / np.sqrt(2048)
    fc_b = 0.1 * jax.random.normal(keys[6], (1,), jnp.float32)
    params["fc_w"] = jnp.pad(fc_w, ((0, 0), (0, 127))).astype(jnp.bfloat16)
    params["fc_scale"] = jnp.ones((1, 128), jnp.float32)
    params["fc_shift"] = jnp.pad(fc_b.reshape(1, 1), ((0, 0), (0, 127)))
    return params


# --------------------------------------------------------------------------
# Forward pass
# --------------------------------------------------------------------------
def _bottleneck_forward(x, p):
    if "downsample" in p:
        identity = conv_bn_act(x, p["downsample"], stride=p["stride"],
                               relu=False)
    else:
        identity = x
    out = conv_bn_act(x, p["conv1"], stride=1, relu=True)
    out = conv_bn_act(out, p["conv2"], stride=p["stride"], relu=True)
    # conv3: BN + residual add + ReLU fused into the matmul epilogue.
    out = conv_bn_act(out, p["conv3"], stride=1, relu=True, identity=identity)
    return out


def resnet50_binary_forward(params, x_nchw):
    # PyTorch NCHW -> NHWC (channels on the lane axis), bf16; stem channels
    # padded 5 -> 8 once so the 7x7 im2col K is aligned.
    x = jnp.transpose(x_nchw, (0, 2, 3, 1)).astype(jnp.bfloat16)
    cpad = params["conv1"]["cin"] - x.shape[-1]
    if cpad > 0:
        x = jnp.pad(x, ((0, 0), (0, 0), (0, 0), (0, cpad)))

    x = conv_bn_act(x, params["conv1"], stride=2, relu=True)
    x = maxpool_3x3_s2(x)

    for li in range(1, 5):
        for blk in params[f"layer{li}"]:
            x = _bottleneck_forward(x, blk)

    pooled = global_avgpool(x)                                 # (N, 2048) f32
    logits = matmul_bn_act(pooled.astype(jnp.bfloat16), params["fc_w"],
                           params["fc_scale"], params["fc_shift"],
                           relu=False, out_dtype=jnp.float32)  # (N, 128)
    return logits[:, 0]                                        # .squeeze(1)


# --------------------------------------------------------------------------
if __name__ == "__main__":
    key = jax.random.PRNGKey(0)
    pkey, xkey = jax.random.split(key)

    params = init_resnet50_binary_params(pkey, in_channels=5)

    # Small, module-consistent input: batch=2, in_channels=5, spatial 16x16.
    x = jax.random.normal(xkey, (2, 5, 16, 16), jnp.float32)

    out = resnet50_binary_forward(params, x)
    out = jax.block_until_ready(out)

    assert out.shape == (2,), out.shape
    assert bool(jnp.all(jnp.isfinite(out)))
    print("KERNEL_OK")
</pallas_src>

<mosaic_0001>
module attributes {stable_mosaic.version = 11 : i64} {
  func.func @_mm_bn_act_kernel(%arg0: i32, %arg1: memref<128x392xbf16, #tpu.memory_space<vmem>>, %arg2: memref<392x64xbf16, #tpu.memory_space<vmem>>, %arg3: memref<1x64xf32, #tpu.memory_space<vmem>>, %arg4: memref<1x64xf32, #tpu.memory_space<vmem>>, %arg5: memref<128x64xbf16, #tpu.memory_space<vmem>>) attributes {dimension_semantics = [#tpu.dimension_semantics<parallel>], iteration_bounds = array<i64: 1>, scalar_prefetch = 0 : i64, scratch_operands = 0 : i64, tpu.core_type = #tpu.core_type<tc>, window_params = [{transform_indices = @transform_0, window_bounds = array<i64: 128, 392>}, {pipeline_mode = #tpu.pipeline_mode<synchronous>, transform_indices = @transform_1, window_bounds = array<i64: 392, 64>}, {pipeline_mode = #tpu.pipeline_mode<synchronous>, transform_indices = @transform_2, window_bounds = array<i64: 1, 64>}, {pipeline_mode = #tpu.pipeline_mode<synchronous>, transform_indices = @transform_3, window_bounds = array<i64: 1, 64>}, {transform_indices = @transform_4, window_bounds = array<i64: 128, 64>}]} {
    %c0 = arith.constant 0 : index
    %c0_0 = arith.constant 0 : index
    %0 = vector.load %arg1[%c0, %c0_0] : memref<128x392xbf16, #tpu.memory_space<vmem>>, vector<128x392xbf16>
    %c0_1 = arith.constant 0 : index
    %c0_2 = arith.constant 0 : index
    %1 = vector.load %arg2[%c0_1, %c0_2] : memref<392x64xbf16, #tpu.memory_space<vmem>>, vector<392x64xbf16>
    %cst = arith.constant dense<0.000000e+00> : vector<128x64xf32>
    %2 = tpu.matmul %0, %1, %cst {dimension_numbers = #tpu.dot_dimension_numbers<[1], [0], [0], [1], [0, 0, 1, 1], [], []>} : vector<128x392xbf16>, vector<392x64xbf16>, vector<128x64xf32> -> vector<128x64xf32>
    %c0_3 = arith.constant 0 : index
    %c0_4 = arith.constant 0 : index
    %3 = vector.load %arg3[%c0_3, %c0_4] : memref<1x64xf32, #tpu.memory_space<vmem>>, vector<1x64xf32>
    %4 = vector.broadcast %3 : vector<1x64xf32> to vector<128x64xf32>
    %5 = arith.mulf %2, %4 : vector<128x64xf32>
    %c0_5 = arith.constant 0 : index
    %c0_6 = arith.constant 0 : index
    %6 = vector.load %arg4[%c0_5, %c0_6] : memref<1x64xf32, #tpu.memory_space<vmem>>, vector<1x64xf32>
    %7 = vector.broadcast %6 : vector<1x64xf32> to vector<128x64xf32>
    %8 = arith.addf %5, %7 : vector<128x64xf32>
    %cst_7 = arith.constant 0.000000e+00 : f32
    %9 = vector.broadcast %cst_7 : f32 to vector<128x64xf32>
    %10 = arith.maximumf %8, %9 : vector<128x64xf32>
    %11 = arith.truncf %10 : vector<128x64xf32> to vector<128x64xbf16>
    %c0_8 = arith.constant 0 : index
    %c0_9 = arith.constant 0 : index
    %12 = vector.load %arg5[%c0_8, %c0_9] : memref<128x64xbf16, #tpu.memory_space<vmem>>, vector<128x64xbf16>
    tpu.vector_store %arg5[%c0_8, %c0_9], %11 {strides = array<i32>} : memref<128x64xbf16, #tpu.memory_space<vmem>>, vector<128x64xbf16>,
    return
  }
  func.func @transform_0(%arg0: i32) -> (i32, i32) {
    %c0_i32 = arith.constant 0 : i32
    %c0_i32_0 = arith.constant 0 : i32
    return %arg0, %c0_i32 : i32, i32
  }
  func.func @transform_1(%arg0: i32) -> (i32, i32) {
    %c0_i32 = arith.constant 0 : i32
    %c0_i32_0 = arith.constant 0 : i32
    %c0_i32_1 = arith.constant 0 : i32
    return %c0_i32, %c0_i32_0 : i32, i32
  }
  func.func @transform_2(%arg0: i32) -> (i32, i32) {
    %c0_i32 = arith.constant 0 : i32
    %c0_i32_0 = arith.constant 0 : i32
    %c0_i32_1 = arith.constant 0 : i32
    return %c0_i32, %c0_i32_0 : i32, i32
  }
  func.func @transform_3(%arg0: i32) -> (i32, i32) {
    %c0_i32 = arith.constant 0 : i32
    %c0_i32_0 = arith.constant 0 : i32
    %c0_i32_1 = arith.constant 0 : i32
    return %c0_i32, %c0_i32_0 : i32, i32
  }
  func.func @transform_4(%arg0: i32) -> (i32, i32) {
    %c0_i32 = arith.constant 0 : i32
    %c0_i32_0 = arith.constant 0 : i32
    return %arg0, %c0_i32 : i32, i32
  }
}

</mosaic_0001>

<llo_original>
// kernel: tpu_custom_call.1
$region0: #{tpu_custom_call.1}
  #allocation0 [shape = 'u32[]', space=smem, size = 0x4, offset = 0x4, fixed_abs, tag = 'smem constant byte address 0x4 - core index']
  #allocation1 [shape = 'u32[72,128]{1,0:T(1,128)}', space=vmem, size = 0x9000, scoped, tag = 'internal scratch']
  %s0 = inlined_call_operand.vmem [shape: bf16[128,392], index: 0, kind: input, shape index: {}]
  %s1 = inlined_call_operand.vmem [shape: bf16[392,64], index: 1, kind: input, shape index: {}]
  %s2 = inlined_call_operand.vmem [shape: f32[1,64], index: 2, kind: input, shape index: {}]
  %s3 = inlined_call_operand.vmem [shape: f32[1,64], index: 3, kind: input, shape index: {}]
  %s4 = inlined_call_operand.vmem [shape: bf16[128,64], index: 4, kind: output, shape index: {}]
  %s5 = sld [smem:[#allocation0]]
  $region26: #{tpu_custom_call.1} parent=0
    _
  %s7 = ssub.s32 1, %s5
  %s8 = scalar_select 0, %s7, %s5
  // Predicated region
  $region2: #{tpu_custom_call.1} parent=0 // pred_check
    _
  $region3: #{tpu_custom_call.1} parent=0 // pred_check_branch
    %10 = sbr.rel (0) target = $region5
  $region4: #{tpu_custom_call.1} parent=0 // pred_region
    _
  $region5: #{tpu_custom_call.1} parent=0 // pred_fallthru
    _
  // Predicated region
  $region6: #{tpu_custom_call.1} parent=0 // pred_check
    _
  $region7: #{tpu_custom_call.1} parent=0 // pred_check_branch
    %12 = sbr.rel (0) target = $region9
  $region8: #{tpu_custom_call.1} parent=0 // pred_region
    _
  $region9: #{tpu_custom_call.1} parent=0 // pred_fallthru
    _
  // Predicated region
  $region10: #{tpu_custom_call.1} parent=0 // pred_check
    _
  $region11: #{tpu_custom_call.1} parent=0 // pred_check_branch
    %14 = sbr.rel (0) target = $region13
  $region12: #{tpu_custom_call.1} parent=0 // pred_region
    _
  $region13: #{tpu_custom_call.1} parent=0 // pred_fallthru
    _
  // Predicated region
  $region14: #{tpu_custom_call.1} parent=0 // pred_check
    _
  $region15: #{tpu_custom_call.1} parent=0 // pred_check_branch
    %16 = sbr.rel (0) target = $region17
  $region16: #{tpu_custom_call.1} parent=0 // pred_region
    _
  $region17: #{tpu_custom_call.1} parent=0 // pred_fallthru
    _
  %v18 = vld [vmem:[%s0] sm:$0xff]
  %v19 = vld [vmem:[%s0 + $0x8] sm:$0xff]
  %v20 = vld [vmem:[%s0 + $0x10] sm:$0xff]
  %v21 = vld [vmem:[%s0 + $0x18] sm:$0xff]
  %v22 = vld [vmem:[%s0 + $0x20] sm:$0xff]
  %v23 = vld [vmem:[%s0 + $0x28] sm:$0xff]
  %v24 = vld [vmem:[%s0 + $0x30] sm:$0xff]
  %v25 = vld [vmem:[%s0 + $0x38] sm:$0xff]
  %v26 = vld [vmem:[%s0 + $0x40] sm:$0xff]
  %v27 = vld [vmem:[%s0 + $0x48] sm:$0xff]
  %v28 = vld [vmem:[%s0 + $0x50] sm:$0xff]
  %v29 = vld [vmem:[%s0 + $0x58] sm:$0xff]
  %v30 = vld [vmem:[%s0 + $0x60] sm:$0xff]
  %v31 = vld [vmem:[%s0 + $0x68] sm:$0xff]
  %v32 = vld [vmem:[%s0 + $0x70] sm:$0xff]
  %v33 = vld [vmem:[%s0 + $0x78] sm:$0xff]
  %v34 = vld [vmem:[%s0 + $0x80] sm:$0xff]
  %v35 = vld [vmem:[%s0 + $0x88] sm:$0xff]
  %v36 = vld [vmem:[%s0 + $0x90] sm:$0xff]
  %v37 = vld [vmem:[%s0 + $0x98] sm:$0xff]
  %v38 = vld [vmem:[%s0 + $0xa0] sm:$0xff]
  %v39 = vld [vmem:[%s0 + $0xa8] sm:$0xff]
  %v40 = vld [vmem:[%s0 + $0xb0] sm:$0xff]
  %v41 = vld [vmem:[%s0 + $0xb8] sm:$0xff]
  %v42 = vld [vmem:[%s0 + $0xc0] sm:$0xff]
  %v43 = vld [vmem:[%s0 + $0xc8] sm:$0xff]
  %v44 = vld [vmem:[%s0 + $0xd0] sm:$0xff]
  %v45 = vld [vmem:[%s0 + $0xd8] sm:$0xff]
  %v46 = vld [vmem:[%s0 + $0xe0] sm:$0xff]
  %v47 = vld [vmem:[%s0 + $0xe8] sm:$0xff]
  %v48 = vld [vmem:[%s0 + $0xf0] sm:$0xff]
  %v49 = vld [vmem:[%s0 + $0xf8] sm:$0xff]
  %v50 = vld [vmem:[%s1] sm:$0xf]
  %v51 = vld [vmem:[%s1 + $0x4] sm:$0xf]
  %v52 = vld [vmem:[%s1 + $0x8] sm:$0xf]
  %v53 = vld [vmem:[%s1 + $0xc] sm:$0xf]
  %v54 = vld [vmem:[%s1 + $0x10] sm:$0xf]
  %v55 = vld [vmem:[%s1 + $0x14] sm:$0xf]
  %v56 = vld [vmem:[%s1 + $0x18] sm:$0xf]
  %v57 = vld [vmem:[%s1 + $0x1c] sm:$0xf]
  %v58 = vld [vmem:[%s1 + $0x20] sm:$0xf]
  %v59 = vld [vmem:[%s1 + $0x24] sm:$0xf]
  %v60 = vld [vmem:[%s1 + $0x28] sm:$0xf]
  %v61 = vld [vmem:[%s1 + $0x2c] sm:$0xf]
  %v62 = vld [vmem:[%s1 + $0x30] sm:$0xf]
  %v63 = vld [vmem:[%s1 + $0x34] sm:$0xf]
  %v64 = vld [vmem:[%s1 + $0x38] sm:$0xf]
  %v65 = vld [vmem:[%s1 + $0x3c] sm:$0xf]
  %v66 = vld [vmem:[%s1 + $0x40] sm:$0xf]
  %v67 = vld [vmem:[%s1 + $0x44] sm:$0xf]
  %v68 = vld [vmem:[%s1 + $0x48] sm:$0xf]
  %v69 = vld [vmem:[%s1 + $0x4c] sm:$0xf]
  %v70 = vld [vmem:[%s1 + $0x50] sm:$0xf]
  %v71 = vld [vmem:[%s1 + $0x54] sm:$0xf]
  %v72 = vld [vmem:[%s1 + $0x58] sm:$0xf]
  %v73 = vld [vmem:[%s1 + $0x5c] sm:$0xf]
  %v74 = vld [vmem:[%s1 + $0x60] sm:$0xf]
  %v75 = vld [vmem:[%s1 + $0x64] sm:$0xf]
  %v76 = vld [vmem:[%s1 + $0x68] sm:$0xf]
  %v77 = vld [vmem:[%s1 + $0x6c] sm:$0xf]
  %v78 = vld [vmem:[%s1 + $0x70] sm:$0xf]
  %v79 = vld [vmem:[%s1 + $0x74] sm:$0xf]
  %v80 = vld [vmem:[%s1 + $0x78] sm:$0xf]
  %v81 = vld [vmem:[%s1 + $0x7c] sm:$0xf]
  %v82 = vld [vmem:[%s1 + $0x80] sm:$0xf]
  %v83 = vld [vmem:[%s1 + $0x84] sm:$0xf]
  %v84 = vld [vmem:[%s1 + $0x88] sm:$0xf]
  %v85 = vld [vmem:[%s1 + $0x8c] sm:$0xf]
  %v86 = vld [vmem:[%s1 + $0x90] sm:$0xf]
  %v87 = vld [vmem:[%s1 + $0x94] sm:$0xf]
  %v88 = vld [vmem:[%s1 + $0x98] sm:$0xf]
  %v89 = vld [vmem:[%s1 + $0x9c] sm:$0xf]
  %v90 = vld [vmem:[%s1 + $0xa0] sm:$0xf]
  %v91 = vld [vmem:[%s1 + $0xa4] sm:$0xf]
  %v92 = vld [vmem:[%s1 + $0xa8] sm:$0xf]
  %v93 = vld [vmem:[%s1 + $0xac] sm:$0xf]
  %v94 = vld [vmem:[%s1 + $0xb0] sm:$0xf]
  %v95 = vld [vmem:[%s1 + $0xb4] sm:$0xf]
  %v96 = vld [vmem:[%s1 + $0xb8] sm:$0xf]
  %v97 = vld [vmem:[%s1 + $0xbc] sm:$0xf]
  %v98 = vld [vmem:[%s1 + $0xc0] sm:$0xf]
  %v131 = vunpack.c.l.b16 %v18
  %v132 = vunpack.c.h.b16 %v18
  %v133 = vunpack.c.l.b16 %v19
  %v134 = vunpack.c.h.b16 %v19
  %v135 = vunpack.c.l.b16 %v20
  %v136 = vunpack.c.h.b16 %v20
  %v137 = vunpack.c.l.b16 %v21
  %v138 = vunpack.c.h.b16 %v21
  %v139 = vunpack.c.l.b16 %v22
  %v140 = vunpack.c.h.b16 %v22
  %v141 = vunpack.c.l.b16 %v23
  %v142 = vunpack.c.h.b16 %v23
  %v143 = vunpack.c.l.b16 %v24
  %v144 = vunpack.c.h.b16 %v24
  %v145 = vunpack.c.l.b16 %v25
  %v146 = vunpack.c.h.b16 %v25
  %v147 = vunpack.c.l.b16 %v26
  %v148 = vunpack.c.h.b16 %v26
  %v149 = vunpack.c.l.b16 %v27
  %v150 = vunpack.c.h.b16 %v27
  %v151 = vunpack.c.l.b16 %v28
  %v152 = vunpack.c.h.b16 %v28
  %v153 = vunpack.c.l.b16 %v29
  %v154 = vunpack.c.h.b16 %v29
  %v155 = vunpack.c.l.b16 %v30
  %v156 = vunpack.c.h.b16 %v30
  %v157 = vunpack.c.l.b16 %v31
  %v158 = vunpack.c.h.b16 %v31
  %v159 = vunpack.c.l.b16 %v32
  %v160 = vunpack.c.h.b16 %v32
  %v161 = vunpack.c.l.b16 %v33
  %v162 = vunpack.c.h.b16 %v33
  %v163 = vunpack.c.l.b16 %v34
  %v164 = vunpack.c.h.b16 %v34
  %v165 = vunpack.c.l.b16 %v35
  %v166 = vunpack.c.h.b16 %v35
  %v167 = vunpack.c.l.b16 %v36
  %v168 = vunpack.c.h.b16 %v36
  %v169 = vunpack.c.l.b16 %v37
  %v170 = vunpack.c.h.b16 %v37
  %v171 = vunpack.c.l.b16 %v38
  %v172 = vunpack.c.h.b16 %v38
  %v173 = vunpack.c.l.b16 %v39
  %v174 = vunpack.c.h.b16 %v39
  %v175 = vunpack.c.l.b16 %v40
  %v176 = vunpack.c.h.b16 %v40
  %v177 = vunpack.c.l.b16 %v41
  %v178 = vunpack.c.h.b16 %v41
  %v179 = vunpack.c.l.b16 %v42
  %v180 = vunpack.c.h.b16 %v42
  %v181 = vunpack.c.l.b16 %v43
  %v182 = vunpack.c.h.b16 %v43
  %v183 = vunpack.c.l.b16 %v44
  %v184 = vunpack.c.h.b16 %v44
  %v185 = vunpack.c.l.b16 %v45
  %v186 = vunpack.c.h.b16 %v45
  %v187 = vunpack.c.l.b16 %v46
  %v188 = vunpack.c.h.b16 %v46
  %v189 = vunpack.c.l.b16 %v47
  %v190 = vunpack.c.h.b16 %v47
  %v191 = vunpack.c.l.b16 %v48
  %v192 = vunpack.c.h.b16 %v48
  %v193 = vunpack.c.l.b16 %v49
  %v194 = vunpack.c.h.b16 %v49
  %v195 = vpack.c.b16 %v135, %v131
  %v196 = vpack.c.b16 %v136, %v132
  %v197 = vpack.c.b16 %v137, %v133
  %v198 = vpack.c.b16 %v138, %v134
  %v199 = vpack.c.b16 %v143, %v139
  %v200 = vpack.c.b16 %v144, %v140
  %v201 = vpack.c.b16 %v145, %v141
  %v202 = vpack.c.b16 %v146, %v142
  %v203 = vpack.c.b16 %v151, %v147
  %v204 = vpack.c.b16 %v152, %v148
  %v205 = vpack.c.b16 %v153, %v149
  %v206 = vpack.c.b16 %v154, %v150
  %v207 = vpack.c.b16 %v159, %v155
  %v208 = vpack.c.b16 %v160, %v156
  %v209 = vpack.c.b16 %v161, %v157
  %v210 = vpack.c.b16 %v162, %v158
  %v211 = vpack.c.b16 %v167, %v163
  %v212 = vpack.c.b16 %v168, %v164
  %v213 = vpack.c.b16 %v169, %v165
  %v214 = vpack.c.b16 %v170, %v166
  %v215 = vpack.c.b16 %v175, %v171
  %v216 = vpack.c.b16 %v176, %v172
  %v217 = vpack.c.b16 %v177, %v173
  %v218 = vpack.c.b16 %v178, %v174
  %v219 = vpack.c.b16 %v183, %v179
  %v220 = vpack.c.b16 %v184, %v180
  %v221 = vpack.c.b16 %v185, %v181
  %v222 = vpack.c.b16 %v186, %v182
  %v223 = vpack.c.b16 %v191, %v187
  %v224 = vpack.c.b16 %v192, %v188
  %v225 = vpack.c.b16 %v193, %v189
  %v226 = vpack.c.b16 %v194, %v190
  %v300 = vunpack.c.l.b16 %v50
  %v301 = vunpack.c.l.b16 %v51
  %v302 = vunpack.c.l.b16 %v52
  %v303 = vunpack.c.l.b16 %v53
  %v304 = vunpack.c.l.b16 %v54
  %v305 = vunpack.c.l.b16 %v55
  %v306 = vunpack.c.l.b16 %v56
  %v307 = vunpack.c.l.b16 %v57
  %v308 = vunpack.c.l.b16 %v58
  %v309 = vunpack.c.l.b16 %v59
  %v310 = vunpack.c.l.b16 %v60
  %v311 = vunpack.c.l.b16 %v61
  %v312 = vunpack.c.l.b16 %v62
  %v313 = vunpack.c.l.b16 %v63
  %v314 = vunpack.c.l.b16 %v64
  %v315 = vunpack.c.l.b16 %v65
  %v316 = vunpack.c.l.b16 %v66
  %v317 = vunpack.c.l.b16 %v67
  %v318 = vunpack.c.l.b16 %v68
  %v319 = vunpack.c.l.b16 %v69
  %v320 = vunpack.c.l.b16 %v70
  %v321 = vunpack.c.l.b16 %v71
  %v322 = vunpack.c.l.b16 %v72
  %v323 = vunpack.c.l.b16 %v73
  %v324 = vunpack.c.l.b16 %v74
  %v325 = vunpack.c.l.b16 %v75
  %v326 = vunpack.c.l.b16 %v76
  %v327 = vunpack.c.l.b16 %v77
  %v328 = vunpack.c.l.b16 %v78
  %v329 = vunpack.c.l.b16 %v79
  %v330 = vunpack.c.l.b16 %v80
  %v331 = vunpack.c.l.b16 %v81
  %v332 = vunpack.c.l.b16 %v82
  %v333 = vunpack.c.l.b16 %v83
  %v334 = vunpack.c.l.b16 %v84
  %v335 = vunpack.c.l.b16 %v85
  %v336 = vunpack.c.l.b16 %v86
  %v337 = vunpack.c.l.b16 %v87
  %v338 = vunpack.c.l.b16 %v88
  %v339 = vunpack.c.l.b16 %v89
  %v340 = vunpack.c.l.b16 %v90
  %v341 = vunpack.c.l.b16 %v91
  %v342 = vunpack.c.l.b16 %v92
  %v343 = vunpack.c.l.b16 %v93
  %v344 = vunpack.c.l.b16 %v94
  %v345 = vunpack.c.l.b16 %v95
  %v346 = vunpack.c.l.b16 %v96
  %v347 = vunpack.c.l.b16 %v97
  %v348 = vunpack.c.l.b16 %v98
  %v349 = vpack.c.b16 %v301, %v300
  %v350 = vpack.c.b16 %v303, %v302
  %v351 = vpack.c.b16 %v305, %v304
  %v352 = vpack.c.b16 %v307, %v306
  %v353 = vpack.c.b16 %v309, %v308
  %v354 = vpack.c.b16 %v311, %v310
  %v355 = vpack.c.b16 %v313, %v312
  %v356 = vpack.c.b16 %v315, %v314
  %v357 = vpack.c.b16 %v317, %v316
  %v358 = vpack.c.b16 %v319, %v318
  %v359 = vpack.c.b16 %v321, %v320
  %v360 = vpack.c.b16 %v323, %v322
  %v361 = vpack.c.b16 %v325, %v324
  %v362 = vpack.c.b16 %v327, %v326
  %v363 = vpack.c.b16 %v329, %v328
  %v364 = vpack.c.b16 %v331, %v330
  %v365 = vpack.c.b16 %v333, %v332
  %v366 = vpack.c.b16 %v335, %v334
  %v367 = vpack.c.b16 %v337, %v336
  %v368 = vpack.c.b16 %v339, %v338
  %v369 = vpack.c.b16 %v341, %v340
  %v370 = vpack.c.b16 %v343, %v342
  %v371 = vpack.c.b16 %v345, %v344
  %v372 = vpack.c.b16 %v347, %v346
  %v373 = vpack.c.b16 %v348, %v348
  %vm398 = vcmask 64512
  %v400 = vsel %vm398, %v198, 0
  %v403 = vsel %vm398, %v202, 0
  %v406 = vsel %vm398, %v206, 0
  %v409 = vsel %vm398, %v210, 0
  %v412 = vsel %vm398, %v214, 0
  %v415 = vsel %vm398, %v218, 0
  %v418 = vsel %vm398, %v222, 0
  %v421 = vsel %vm398, %v226, 0
  %vm423 = vcmask 1043456
  %v425 = vsel %vm423, %v373, 0
  %427 = vmatpush.bf16.msra.mxu0 %v356
  %428 = vmatpush.bf16.msra.mxu0 %v355
  %429 = vmatpush.bf16.msra.mxu0 %v354
  %430 = vmatpush.bf16.msra.mxu0 %v353
  %431 = vmatpush.bf16.msra.mxu0 %v352
  %432 = vmatpush.bf16.msra.mxu0 %v351
  %433 = vmatpush.bf16.msra.mxu0 %v350
  %434 = vmatpush.bf16.msra.mxu0 %v349
  %435 = vmatmul.bf16.gmra.mxu0 %v195
  %v436 = vpop.f32.mrf.mxu0
  %v437 = vadd.f32 0.0, %v436
  %v438 = vpop.f32.mrf.mxu0
  %v439 = vadd.f32 0.0, %v438
  %440 = vmatmul.bf16.gmra.mxu0 %v199
  %v441 = vpop.f32.mrf.mxu0
  %v442 = vadd.f32 0.0, %v441
  %v443 = vpop.f32.mrf.mxu0
  %v444 = vadd.f32 0.0, %v443
  %445 = vmatmul.bf16.gmra.mxu0 %v203
  %v446 = vpop.f32.mrf.mxu0
  %v447 = vadd.f32 0.0, %v446
  %v448 = vpop.f32.mrf.mxu0
  %v449 = vadd.f32 0.0, %v448
  %450 = vmatmul.bf16.gmra.mxu0 %v207
  %v451 = vpop.f32.mrf.mxu0
  %v452 = vadd.f32 0.0, %v451
  %v453 = vpop.f32.mrf.mxu0
  %v454 = vadd.f32 0.0, %v453
  %455 = vmatmul.bf16.gmra.mxu0 %v211
  %v456 = vpop.f32.mrf.mxu0
  %v457 = vadd.f32 0.0, %v456
  %v458 = vpop.f32.mrf.mxu0
  %v459 = vadd.f32 0.0, %v458
  %460 = vmatmul.bf16.gmra.mxu0 %v215
  %v461 = vpop.f32.mrf.mxu0
  %v462 = vadd.f32 0.0, %v461
  %v463 = vpop.f32.mrf.mxu0
  %v464 = vadd.f32 0.0, %v463
  %465 = vmatmul.bf16.gmra.mxu0 %v219
  %v466 = vpop.f32.mrf.mxu0
  %v467 = vadd.f32 0.0, %v466
  %v468 = vpop.f32.mrf.mxu0
  %v469 = vadd.f32 0.0, %v468
  %470 = vmatmul.bf16.gmra.mxu0 %v223
  %v471 = vpop.f32.mrf.mxu0
  %v472 = vadd.f32 0.0, %v471
  %v473 = vpop.f32.mrf.mxu0
  %v474 = vadd.f32 0.0, %v473
  %475 = vdwg.mxu0
  %476 = vmatpush.bf16.msra.mxu0 %v364
  %477 = vmatpush.bf16.msra.mxu0 %v363
  %478 = vmatpush.bf16.msra.mxu0 %v362
  %479 = vmatpush.bf16.msra.mxu0 %v361
  %480 = vmatpush.bf16.msra.mxu0 %v360
  %481 = vmatpush.bf16.msra.mxu0 %v359
  %482 = vmatpush.bf16.msra.mxu0 %v358
  %483 = vmatpush.bf16.msra.mxu0 %v357
  %484 = vmatmul.bf16.gmra.mxu0 %v196
  %v485 = vpop.f32.mrf.mxu0
  %v486 = vadd.f32 %v437, %v485
  %v487 = vpop.f32.mrf.mxu0
  %v488 = vadd.f32 %v439, %v487
  %489 = vmatmul.bf16.gmra.mxu0 %v200
  %v490 = vpop.f32.mrf.mxu0
  %v491 = vadd.f32 %v442, %v490
  %v492 = vpop.f32.mrf.mxu0
  %v493 = vadd.f32 %v444, %v492
  %494 = vmatmul.bf16.gmra.mxu0 %v204
  %v495 = vpop.f32.mrf.mxu0
  %v496 = vadd.f32 %v447, %v495
  %v497 = vpop.f32.mrf.mxu0
  %v498 = vadd.f32 %v449, %v497
  %499 = vmatmul.bf16.gmra.mxu0 %v208
  %v500 = vpop.f32.mrf.mxu0
  %v501 = vadd.f32 %v452, %v500
  %v502 = vpop.f32.mrf.mxu0
  %v503 = vadd.f32 %v454, %v502
  %504 = vmatmul.bf16.gmra.mxu0 %v212
  %v505 = vpop.f32.mrf.mxu0
  %v506 = vadd.f32 %v457, %v505
  %v507 = vpop.f32.mrf.mxu0
  %v508 = vadd.f32 %v459, %v507
  %509 = vmatmul.bf16.gmra.mxu0 %v216
  %v510 = vpop.f32.mrf.mxu0
  %v511 = vadd.f32 %v462, %v510
  %v512 = vpop.f32.mrf.mxu0
  %v513 = vadd.f32 %v464, %v512
  %514 = vmatmul.bf16.gmra.mxu0 %v220
  %v515 = vpop.f32.mrf.mxu0
  %v516 = vadd.f32 %v467, %v515
  %v517 = vpop.f32.mrf.mxu0
  %v518 = vadd.f32 %v469, %v517
  %519 = vmatmul.bf16.gmra.mxu0 %v224
  %v520 = vpop.f32.mrf.mxu0
  %v521 = vadd.f32 %v472, %v520
  %v522 = vpop.f32.mrf.mxu0
  %v523 = vadd.f32 %v474, %v522
  %524 = vdwg.mxu0
  %525 = vmatpush.bf16.msra.mxu0 %v372
  %526 = vmatpush.bf16.msra.mxu0 %v371
  %527 = vmatpush.bf16.msra.mxu0 %v370
  %528 = vmatpush.bf16.msra.mxu0 %v369
  %529 = vmatpush.bf16.msra.mxu0 %v368
  %530 = vmatpush.bf16.msra.mxu0 %v367
  %531 = vmatpush.bf16.msra.mxu0 %v366
  %532 = vmatpush.bf16.msra.mxu0 %v365
  %533 = vmatmul.bf16.gmra.mxu0 %v197
  %v534 = vpop.f32.mrf.mxu0
  %v535 = vadd.f32 %v486, %v534
  %v536 = vpop.f32.mrf.mxu0
  %v537 = vadd.f32 %v488, %v536
  %538 = vmatmul.bf16.gmra.mxu0 %v201
  %v539 = vpop.f32.mrf.mxu0
  %v540 = vadd.f32 %v491, %v539
  %v541 = vpop.f32.mrf.mxu0
  %v542 = vadd.f32 %v493, %v541
  %543 = vmatmul.bf16.gmra.mxu0 %v205
  %v544 = vpop.f32.mrf.mxu0
  %v545 = vadd.f32 %v496, %v544
  %v546 = vpop.f32.mrf.mxu0
  %v547 = vadd.f32 %v498, %v546
  %548 = vmatmul.bf16.gmra.mxu0 %v209
  %v549 = vpop.f32.mrf.mxu0
  %v550 = vadd.f32 %v501, %v549
  %v551 = vpop.f32.mrf.mxu0
  %v552 = vadd.f32 %v503, %v551
  %553 = vmatmul.bf16.gmra.mxu0 %v213
  %v554 = vpop.f32.mrf.mxu0
  %v555 = vadd.f32 %v506, %v554
  %v556 = vpop.f32.mrf.mxu0
  %v557 = vadd.f32 %v508, %v556
  %558 = vmatmul.bf16.gmra.mxu0 %v217
  %v559 = vpop.f32.mrf.mxu0
  %v560 = vadd.f32 %v511, %v559
  %v561 = vpop.f32.mrf.mxu0
  %v562 = vadd.f32 %v513, %v561
  %563 = vmatmul.bf16.gmra.mxu0 %v221
  %v564 = vpop.f32.mrf.mxu0
  %v565 = vadd.f32 %v516, %v564
  %v566 = vpop.f32.mrf.mxu0
  %v567 = vadd.f32 %v518, %v566
  %568 = vmatmul.bf16.gmra.mxu0 %v225
  %v569 = vpop.f32.mrf.mxu0
  %v570 = vadd.f32 %v521, %v569
  %v571 = vpop.f32.mrf.mxu0
  %v572 = vadd.f32 %v523, %v571
  %573 = vdwg.mxu0
  %574 = vmatpush.bf16.msra.mxu0 0
  %575 = vmatpush.bf16.msra.mxu0 0
  %576 = vmatpush.bf16.msra.mxu0 0
  %577 = vmatpush.bf16.msra.mxu0 0
  %578 = vmatpush.bf16.msra.mxu0 0
  %579 = vmatpush.bf16.msra.mxu0 0
  %580 = vmatpush.bf16.msra.mxu0 0
  %581 = vmatpush.bf16.msra.mxu0 %v425
  %582 = vmatmul.bf16.gmra.mxu0 %v400
  %v583 = vpop.f32.mrf.mxu0
  %v584 = vadd.f32 %v535, %v583
  %v585 = vpop.f32.mrf.mxu0
  %v586 = vadd.f32 %v537, %v585
  %587 = vmatmul.bf16.gmra.mxu0 %v403
  %v588 = vpop.f32.mrf.mxu0
  %v589 = vadd.f32 %v540, %v588
  %v590 = vpop.f32.mrf.mxu0
  %v591 = vadd.f32 %v542, %v590
  %592 = vmatmul.bf16.gmra.mxu0 %v406
  %v593 = vpop.f32.mrf.mxu0
  %v594 = vadd.f32 %v545, %v593
  %v595 = vpop.f32.mrf.mxu0
  %v596 = vadd.f32 %v547, %v595
  %597 = vmatmul.bf16.gmra.mxu0 %v409
  %v598 = vpop.f32.mrf.mxu0
  %v599 = vadd.f32 %v550, %v598
  %v600 = vpop.f32.mrf.mxu0
  %v601 = vadd.f32 %v552, %v600
  %602 = vmatmul.bf16.gmra.mxu0 %v412
  %v603 = vpop.f32.mrf.mxu0
  %v604 = vadd.f32 %v555, %v603
  %v605 = vpop.f32.mrf.mxu0
  %v606 = vadd.f32 %v557, %v605
  %607 = vmatmul.bf16.gmra.mxu0 %v415
  %v608 = vpop.f32.mrf.mxu0
  %v609 = vadd.f32 %v560, %v608
  %v610 = vpop.f32.mrf.mxu0
  %v611 = vadd.f32 %v562, %v610
  %612 = vmatmul.bf16.gmra.mxu0 %v418
  %v613 = vpop.f32.mrf.mxu0
  %v614 = vadd.f32 %v565, %v613
  %v615 = vpop.f32.mrf.mxu0
  %v616 = vadd.f32 %v567, %v615
  %617 = vmatmul.bf16.gmra.mxu0 %v421
  %v618 = vpop.f32.mrf.mxu0
  %v619 = vadd.f32 %v570, %v618
  %v620 = vpop.f32.mrf.mxu0
  %v621 = vadd.f32 %v572, %v620
  %622 = vdwg.mxu0
  %v623 = vld [vmem:[%s2] sm:$0x1]
  %v625 = vperm.slane %v623, 0
  %v627 = vmul.f32 %v584, %v625
  %v628 = vmul.f32 %v586, %v625
  %v629 = vmul.f32 %v589, %v625
  %v630 = vmul.f32 %v591, %v625
  %v631 = vmul.f32 %v594, %v625
  %v632 = vmul.f32 %v596, %v625
  %v633 = vmul.f32 %v599, %v625
  %v634 = vmul.f32 %v601, %v625
  %v635 = vmul.f32 %v604, %v625
  %v636 = vmul.f32 %v606, %v625
  %v637 = vmul.f32 %v609, %v625
  %v638 = vmul.f32 %v611, %v625
  %v639 = vmul.f32 %v614, %v625
  %v640 = vmul.f32 %v616, %v625
  %v641 = vmul.f32 %v619, %v625
  %v642 = vmul.f32 %v621, %v625
  %v643 = vld [vmem:[%s3] sm:$0x1]
  %v645 = vperm.slane %v643, 0
  %v647 = vadd.f32 %v627, %v645
  %v648 = vadd.f32 %v628, %v645
  %v649 = vadd.f32 %v629, %v645
  %v650 = vadd.f32 %v630, %v645
  %v651 = vadd.f32 %v631, %v645
  %v652 = vadd.f32 %v632, %v645
  %v653 = vadd.f32 %v633, %v645
  %v654 = vadd.f32 %v634, %v645
  %v655 = vadd.f32 %v635, %v645
  %v656 = vadd.f32 %v636, %v645
  %v657 = vadd.f32 %v637, %v645
  %v658 = vadd.f32 %v638, %v645
  %v659 = vadd.f32 %v639, %v645
  %v660 = vadd.f32 %v640, %v645
  %v661 = vadd.f32 %v641, %v645
  %v662 = vadd.f32 %v642, %v645
  %v663 = vmax.f32 %v647, 0.0
  %v664 = vmax.f32 %v648, 0.0
  %v665 = vmax.f32 %v649, 0.0
  %v666 = vmax.f32 %v650, 0.0
  %v667 = vmax.f32 %v651, 0.0
  %v668 = vmax.f32 %v652, 0.0
  %v669 = vmax.f32 %v653, 0.0
  %v670 = vmax.f32 %v654, 0.0
  %v671 = vmax.f32 %v655, 0.0
  %v672 = vmax.f32 %v656, 0.0
  %v673 = vmax.f32 %v657, 0.0
  %v674 = vmax.f32 %v658, 0.0
  %v675 = vmax.f32 %v659, 0.0
  %v676 = vmax.f32 %v660, 0.0
  %v677 = vmax.f32 %v661, 0.0
  %v678 = vmax.f32 %v662, 0.0
  %v679 = vpack.c.bf16 %v663, %v663
  %v680 = vpack.c.bf16 %v664, %v664
  %v681 = vpack.c.bf16 %v665, %v665
  %v682 = vpack.c.bf16 %v666, %v666
  %v683 = vpack.c.bf16 %v667, %v667
  %v684 = vpack.c.bf16 %v668, %v668
  %v685 = vpack.c.bf16 %v669, %v669
  %v686 = vpack.c.bf16 %v670, %v670
  %v687 = vpack.c.bf16 %v671, %v671
  %v688 = vpack.c.bf16 %v672, %v672
  %v689 = vpack.c.bf16 %v673, %v673
  %v690 = vpack.c.bf16 %v674, %v674
  %v691 = vpack.c.bf16 %v675, %v675
  %v692 = vpack.c.bf16 %v676, %v676
  %v693 = vpack.c.bf16 %v677, %v677
  %v694 = vpack.c.bf16 %v678, %v678
  %vm695 = vcmask 519168
  %696 = vst.msk [vmem:[%s4] sm:$0xf] %vm695, %v679
  %697 = vst.msk [vmem:[%s4 + $0x4] sm:$0xf] %vm695, %v680
  %698 = vst.msk [vmem:[%s4 + $0x8] sm:$0xf] %vm695, %v681
  %699 = vst.msk [vmem:[%s4 + $0xc] sm:$0xf] %vm695, %v682
  %700 = vst.msk [vmem:[%s4 + $0x10] sm:$0xf] %vm695, %v683
  %701 = vst.msk [vmem:[%s4 + $0x14] sm:$0xf] %vm695, %v684
  %702 = vst.msk [vmem:[%s4 + $0x18] sm:$0xf] %vm695, %v685
  %703 = vst.msk [vmem:[%s4 + $0x1c] sm:$0xf] %vm695, %v686
  %704 = vst.msk [vmem:[%s4 + $0x20] sm:$0xf] %vm695, %v687
  %705 = vst.msk [vmem:[%s4 + $0x24] sm:$0xf] %vm695, %v688
  %706 = vst.msk [vmem:[%s4 + $0x28] sm:$0xf] %vm695, %v689
  %707 = vst.msk [vmem:[%s4 + $0x2c] sm:$0xf] %vm695, %v690
  %708 = vst.msk [vmem:[%s4 + $0x30] sm:$0xf] %vm695, %v691
  %709 = vst.msk [vmem:[%s4 + $0x34] sm:$0xf] %vm695, %v692
  %710 = vst.msk [vmem:[%s4 + $0x38] sm:$0xf] %vm695, %v693
  %711 = vst.msk [vmem:[%s4 + $0x3c] sm:$0xf] %vm695, %v694
  // Predicated region
  $region18: #{tpu_custom_call.1} parent=0 // pred_check
    _
  $region19: #{tpu_custom_call.1} parent=0 // pred_check_branch
    %713 = sbr.rel (0) target = $region21
  $region20: #{tpu_custom_call.1} parent=0 // pred_region
    _
  $region21: #{tpu_custom_call.1} parent=0 // pred_fallthru
    _
  // Predicated region
  $region22: #{tpu_custom_call.1} parent=0 // pred_check
    _
  $region23: #{tpu_custom_call.1} parent=0 // pred_check_branch
    %715 = sbr.rel (0) target = $region25
  $region24: #{tpu_custom_call.1} parent=0 // pred_region
    _
  $region25: #{tpu_custom_call.1} parent=0 // pred_fallthru
    _

</llo_original>
